<compile_context>
chip_gen: v5e
topology: v5e:2x2
jax: 0.10.0
libtpu: 0.0.40
codegen_flags: <defaults>
</compile_context>

<pallas_src>
import functools

import jax
import jax.numpy as jnp
import numpy as np
from jax.experimental import pallas as pl
from jax.experimental.pallas import tpu as pltpu

_NC = 2          # leading "core" grid axis ("parallel"); v7x has 2 TensorCores.
_OUT_ROWS = 8    # partial-sum rows per core (6 used: root/local/global/joint/accel/shape)


def _cdiv(a, b):
    return -(-a // b)


def _round_up(a, m):
    return _cdiv(a, m) * m


def _make_kernel(loss_type, t_true, t_pad):
    is_l1 = (loss_type == "l1")

    def _elem(x):
        return jnp.abs(x) if is_l1 else x * x

    def _accum_row(out_ref, row, v):
        """Reduce v over all leading axes to a lane vector; accumulate into one row."""
        w = v.shape[-1]
        if w <= 128:
            vec = v
            while vec.ndim > 1:
                vec = jnp.sum(vec, axis=0)          # sublane / leading-dim reduces only
            out_ref[row:row + 1, 0:w] += vec[None, :]
        else:
            # TODO(synk): feature dims wider than 128 lanes fall back to a scalar add.
            out_ref[row:row + 1, 0:1] += jnp.sum(v)[None, None]

    def kernel(pr_ref, gr_ref, plr_ref, glr_ref, pgr_ref, ggr_ref,
               pj_ref, gj_ref, ps_ref, out_ref):
        g = pl.program_id(1)

        @pl.when(g == 0)
        def _init():
            out_ref[...] = jnp.zeros_like(out_ref)

        def diff(a_ref, b_ref):
            return a_ref[...].astype(jnp.float32) - b_ref[...].astype(jnp.float32)

        # --- pure elementwise-difference reductions on lane-dense (rows,128) blocks
        _accum_row(out_ref, 0, _elem(diff(pr_ref, gr_ref)))
        _accum_row(out_ref, 1, _elem(diff(plr_ref, glr_ref)))
        _accum_row(out_ref, 2, _elem(diff(pgr_ref, ggr_ref)))

        # --- joint position + acceleration share one difference d: (TB*T_pad, Dj) ---
        d = diff(pj_ref, gj_ref)
        _accum_row(out_ref, 3, _elem(d))

        L = d.shape[0]
        d_prev = pltpu.roll(d, shift=1, axis=0)       # d[r-1]
        d_next = pltpu.roll(d, shift=L - 1, axis=0)   # d[r+1]
        acc2 = d_prev - 2.0 * d + d_next              # centered second difference
        # valid rows: local time index t = r mod t_pad in [1, T-2].  Float mod is
        # exact for these magnitudes (< 2^24); the only rounding failure maps
        # t=0 -> t_pad, which stays invalid.  The mask also kills the roll wrap
        # across stacked batch elements and the zero-padded time rows.
        r = jax.lax.broadcasted_iota(jnp.int32, acc2.shape, 0).astype(jnp.float32)
        t = r - jnp.floor(r * (1.0 / t_pad)) * float(t_pad)
        valid = jnp.logical_and(t > 0.5, t < (t_true - 1.5))
        acc2 = jnp.where(valid, acc2, 0.0)
        _accum_row(out_ref, 4, _elem(acc2))

        # --- shape loss: pred_shape vs its own temporal mean (direct centered form)
        ps = ps_ref[...].astype(jnp.float32)                       # (TB, T, Ds)
        mean_t = jnp.sum(ps, axis=1, keepdims=True) * (1.0 / t_true)
        _accum_row(out_ref, 5, _elem(ps - mean_t))

    return kernel


@functools.partial(
    jax.jit,
    static_argnames=("loss_type", "root_orientation_weight", "local_pose_weight",
                     "global_pose_weight", "joint_position_weight",
                     "acc_loss_weight", "shape_loss_weight"))
def pose_joint_loss(pred_root_orientation, pred_local_rotation, pred_global_rotation,
                    pred_joint_position, pred_shape,
                    gt_root_orientation, gt_local_rotation, gt_global_rotation,
                    gt_joint_position, gt_shape,
                    *, loss_type="l2",
                    root_orientation_weight=1.0, local_pose_weight=1.0,
                    global_pose_weight=1.0, joint_position_weight=1.0,
                    acc_loss_weight=0.5, shape_loss_weight=0.5):
    assert (pred_root_orientation.shape == gt_root_orientation.shape
            and pred_local_rotation.shape == gt_local_rotation.shape
            and pred_global_rotation.shape == gt_global_rotation.shape
            and pred_joint_position.shape == gt_joint_position.shape
            and pred_shape.shape == gt_shape.shape), "GT and Pred have different shape"
    if loss_type not in ("l1", "l2", "l2sum"):
        raise NotImplementedError(f"Loss type [{loss_type:s}] is not found.")

    B, T, Dj = pred_joint_position.shape
    _, _, Ds = pred_shape.shape
    if T < 3:
        # TODO(synk): PyTorch reference yields NaN for T < 3; unsupported here.
        raise NotImplementedError("PoseJointLoss Pallas kernel requires T >= 3.")

    T_pad = _round_up(T, 8)          # sublane-aligned time axis (always roll path)

    # --- per-generation VMEM budget -> batch-block size TB ----------------------
    try:
        vmem_cap = int(pltpu.get_tpu_info().vmem_capacity_bytes)
    except Exception:                 # pragma: no cover - conservative fallback
        vmem_cap = 64 << 20           # v7x physical VMEM
    budget = max(vmem_cap - (8 << 20), 16 << 20)

    pure_pairs = ((pred_root_orientation, gt_root_orientation),
                  (pred_local_rotation, gt_local_rotation),
                  (pred_global_rotation, gt_global_rotation))
    per_elem_bytes = 0
    for p_, g_ in pure_pairs:
        per_elem_bytes += (p_.dtype.itemsize + g_.dtype.itemsize) * T * p_.shape[2]
    per_elem_bytes += (pred_joint_position.dtype.itemsize
                       + gt_joint_position.dtype.itemsize) * T_pad * Dj
    per_elem_bytes += pred_shape.dtype.itemsize * T * Ds
    per_elem_bytes = max(per_elem_bytes, 1)

    tb_cap = max(1, (budget // 2 - (2 << 20)) // per_elem_bytes)   # double-buffered
    tb_target = max(1, (4 << 20) // per_elem_bytes)                # ~4 MiB payload/step
    TB = int(max(1, min(tb_cap, tb_target, _cdiv(B, _NC))))

    NB = _cdiv(B, TB)                 # batch blocks
    G = _cdiv(NB, _NC)                # blocks per core
    n_blocks = _NC * G
    B_pad = n_blocks * TB

    # --- input preprocessing (free / cheap XLA reshapes + zero pads) ------------
    def _densify(x):
        """Flatten to lane-dense (n_blocks, rows, 128) chunks (zero padded)."""
        n = int(np.prod(x.shape))
        rows = max(8, _round_up(_cdiv(n, n_blocks * 128), 8))
        total = n_blocks * rows * 128
        flat = x.reshape(-1)
        if total > n:
            flat = jnp.pad(flat, (0, total - n))
        return flat.reshape(n_blocks, rows, 128)

    def _prep_joint(x):
        if T_pad > T:
            x = jnp.pad(x, ((0, 0), (0, T_pad - T), (0, 0)))
        if B_pad > B:
            x = jnp.pad(x, ((0, B_pad - B), (0, 0), (0, 0)))
        return x.reshape(n_blocks, TB * T_pad, Dj)

    def _prep_shape(x):
        if B_pad > B:
            x = jnp.pad(x, ((0, B_pad - B), (0, 0), (0, 0)))
        return x

    # NOTE: gt_shape is never read (reference compares pred_shape to its own mean).
    inputs = (_densify(pred_root_orientation), _densify(gt_root_orientation),
              _densify(pred_local_rotation), _densify(gt_local_rotation),
              _densify(pred_global_rotation), _densify(gt_global_rotation),
              _prep_joint(pred_joint_position), _prep_joint(gt_joint_position),
              _prep_shape(pred_shape))

    idx = lambda c, g: (c * G + g, 0, 0)
    in_specs = []
    for a in inputs[:8]:
        in_specs.append(pl.BlockSpec((None, a.shape[1], a.shape[2]), idx))
    in_specs.append(pl.BlockSpec((TB, T, Ds), idx))

    out_spec = pl.BlockSpec((_OUT_ROWS, 128), lambda c, g: (c, 0))

    # Double-buffered per-step working set -> explicit per-generation VMEM limit.
    step_bytes = 0
    for a in inputs[:8]:
        step_bytes += int(np.prod(a.shape[1:])) * a.dtype.itemsize
    step_bytes += TB * T * Ds * pred_shape.dtype.itemsize
    step_bytes += _OUT_ROWS * 128 * 4
    vmem_limit = int(min(budget, max(2 * step_bytes + (4 << 20), 16 << 20)))

    kernel = _make_kernel(loss_type, T, T_pad)

    raw = pl.pallas_call(
        kernel,
        out_shape=jax.ShapeDtypeStruct((_NC * _OUT_ROWS, 128), jnp.float32),
        grid_spec=pltpu.PrefetchScalarGridSpec(
            num_scalar_prefetch=0,
            grid=(_NC, G),
            in_specs=in_specs,
            out_specs=out_spec),
        compiler_params=pltpu.CompilerParams(
            dimension_semantics=("parallel", "arbitrary"),
            vmem_limit_bytes=vmem_limit),
    )(*inputs)

    # --- tiny XLA epilogue: sum per-core lane partials, normalize, weight -------
    sums = raw.reshape(_NC, _OUT_ROWS, 128).sum(axis=(0, 2))

    is_mean = loss_type in ("l1", "l2")

    def _norm(s, n):
        return s / jnp.float32(n) if is_mean else s

    root_l = _norm(sums[0], pred_root_orientation.size)
    local_l = _norm(sums[1], pred_local_rotation.size)
    global_l = _norm(sums[2], pred_global_rotation.size)
    joint_l = _norm(sums[3], pred_joint_position.size)
    accel_l = _norm(sums[4], B * (T - 2) * Dj)
    shape_l = _norm(sums[5], pred_shape.size)
    total_l = (root_orientation_weight * root_l + local_pose_weight * local_l
               + global_pose_weight * global_l + joint_position_weight * joint_l
               + acc_loss_weight * accel_l + shape_loss_weight * shape_l)
    return (root_l, local_l, global_l, joint_l, accel_l, shape_l, total_l)


def _reference(pr, plr, pgr, pj, ps, gr, glr, ggr, gj, gs, loss_type, weights):
    def lf(a, b):
        d = np.asarray(a, np.float64) - np.asarray(b, np.float64)
        if loss_type == "l1":
            s = np.sum(np.abs(d))
        else:
            s = np.sum(d * d)
        return s if loss_type == "l2sum" else s / d.size

    w_root, w_local, w_global, w_joint, w_acc, w_shape = weights
    r = lf(pr, gr)
    l = lf(plr, glr)
    g = lf(pgr, ggr)
    j = lf(pj, gj)
    ps64 = np.asarray(ps, np.float64)
    s = lf(ps64, np.repeat(ps64.mean(axis=1, keepdims=True), ps.shape[1], axis=1))
    a_gt = gj[:, :-2, :] - 2 * gj[:, 1:-1, :] + gj[:, 2:, :]
    a_pr = pj[:, :-2, :] - 2 * pj[:, 1:-1, :] + pj[:, 2:, :]
    a = lf(a_pr, a_gt)
    tot = (w_root * r + w_local * l + w_global * g + w_joint * j
           + w_acc * a + w_shape * s)
    return np.array([r, l, g, j, a, s, tot])


if __name__ == "__main__":
    weights_kw = dict(root_orientation_weight=1.0, local_pose_weight=1.0,
                      global_pose_weight=1.0, joint_position_weight=1.0,
                      acc_loss_weight=0.5, shape_loss_weight=0.5)
    weights = (1.0, 1.0, 1.0, 1.0, 0.5, 0.5)
    dims = dict(root=6, local=144, glob=144, joint=72, shape=10)

    key = jax.random.PRNGKey(0)
    # (B=2, T=8): aligned path; (B=5, T=7): exercises T/B zero-padding + TB>1 blocks.
    for (B, T) in ((2, 8), (5, 7)):
        keys = jax.random.split(key, 10)
        mk = lambda k, d: jax.random.normal(k, (B, T, d), jnp.float32)
        pr, plr, pgr = mk(keys[0], dims["root"]), mk(keys[1], dims["local"]), mk(keys[2], dims["glob"])
        pj, ps = mk(keys[3], dims["joint"]), mk(keys[4], dims["shape"])
        gr, glr, ggr = mk(keys[5], dims["root"]), mk(keys[6], dims["local"]), mk(keys[7], dims["glob"])
        gj, gs = mk(keys[8], dims["joint"]), mk(keys[9], dims["shape"])

        for loss_type in ("l2", "l1", "l2sum"):
            outs = jax.block_until_ready(
                pose_joint_loss(pr, plr, pgr, pj, ps, gr, glr, ggr, gj, gs,
                                loss_type=loss_type, **weights_kw))
            got = np.array([float(o) for o in outs])
            ref = _reference(np.asarray(pr), np.asarray(plr), np.asarray(pgr),
                             np.asarray(pj), np.asarray(ps),
                             np.asarray(gr), np.asarray(glr), np.asarray(ggr),
                             np.asarray(gj), np.asarray(gs), loss_type, weights)
            np.testing.assert_allclose(got, ref, rtol=1e-5, atol=1e-5)

    print("KERNEL_OK")
</pallas_src>

<mosaic_0001>
module attributes {stable_mosaic.version = 11 : i64} {
  func.func @kernel(%arg0: i32, %arg1: i32, %arg2: memref<1x8x128xf32, #tpu.memory_space<vmem>>, %arg3: memref<1x8x128xf32, #tpu.memory_space<vmem>>, %arg4: memref<1x16x128xf32, #tpu.memory_space<vmem>>, %arg5: memref<1x16x128xf32, #tpu.memory_space<vmem>>, %arg6: memref<1x16x128xf32, #tpu.memory_space<vmem>>, %arg7: memref<1x16x128xf32, #tpu.memory_space<vmem>>, %arg8: memref<1x8x72xf32, #tpu.memory_space<vmem>>, %arg9: memref<1x8x72xf32, #tpu.memory_space<vmem>>, %arg10: memref<1x8x10xf32, #tpu.memory_space<vmem>>, %arg11: memref<8x128xf32, #tpu.memory_space<vmem>>) attributes {dimension_semantics = [#tpu.dimension_semantics<parallel>, #tpu.dimension_semantics<arbitrary>], iteration_bounds = array<i64: 2, 1>, scalar_prefetch = 0 : i64, scratch_operands = 0 : i64, tpu.core_type = #tpu.core_type<tc>, window_params = [{transform_indices = @transform_0, window_bounds = array<i64: 1, 8, 128>}, {transform_indices = @transform_1, window_bounds = array<i64: 1, 8, 128>}, {transform_indices = @transform_2, window_bounds = array<i64: 1, 16, 128>}, {transform_indices = @transform_3, window_bounds = array<i64: 1, 16, 128>}, {transform_indices = @transform_4, window_bounds = array<i64: 1, 16, 128>}, {transform_indices = @transform_5, window_bounds = array<i64: 1, 16, 128>}, {transform_indices = @transform_6, window_bounds = array<i64: 1, 8, 72>}, {transform_indices = @transform_7, window_bounds = array<i64: 1, 8, 72>}, {transform_indices = @transform_8, window_bounds = array<i64: 1, 8, 10>}, {transform_indices = @transform_9, window_bounds = array<i64: 8, 128>}]} {
    %c0_i32 = arith.constant 0 : i32
    %0 = arith.cmpi eq, %arg1, %c0_i32 : i32
    %1 = arith.extui %0 : i1 to i32
    %c0_i32_0 = arith.constant 0 : i32
    %2 = arith.cmpi ne, %1, %c0_i32_0 : i32
    scf.if %2 {
      %cst_60 = arith.constant 0.000000e+00 : f32
      %88 = vector.broadcast %cst_60 : f32 to vector<8x128xf32>
      %c0_61 = arith.constant 0 : index
      %c0_62 = arith.constant 0 : index
      %89 = vector.load %arg11[%c0_61, %c0_62] : memref<8x128xf32, #tpu.memory_space<vmem>>, vector<8x128xf32>
      tpu.vector_store %arg11[%c0_61, %c0_62], %88 {strides = array<i32>} : memref<8x128xf32, #tpu.memory_space<vmem>>, vector<8x128xf32>,
    } else {
    }
    %c0 = arith.constant 0 : index
    %c0_1 = arith.constant 0 : index
    %c0_2 = arith.constant 0 : index
    %3 = vector.load %arg2[%c0, %c0_1, %c0_2] : memref<1x8x128xf32, #tpu.memory_space<vmem>>, vector<1x8x128xf32>
    %4 = vector.shape_cast %3 : vector<1x8x128xf32> to vector<8x128xf32>
    %c0_3 = arith.constant 0 : index
    %c0_4 = arith.constant 0 : index
    %c0_5 = arith.constant 0 : index
    %5 = vector.load %arg3[%c0_3, %c0_4, %c0_5] : memref<1x8x128xf32, #tpu.memory_space<vmem>>, vector<1x8x128xf32>
    %6 = vector.shape_cast %5 : vector<1x8x128xf32> to vector<8x128xf32>
    %7 = arith.subf %4, %6 : vector<8x128xf32>
    %8 = arith.mulf %7, %7 : vector<8x128xf32>
    %cst = arith.constant dense<0.000000e+00> : vector<128xf32>
    %9 = vector.multi_reduction <add>, %8, %cst [0] : vector<8x128xf32> to vector<128xf32>
    %c0_6 = arith.constant 0 : index
    %c0_7 = arith.constant 0 : index
    %10 = vector.load %arg11[%c0_6, %c0_7] : memref<8x128xf32, #tpu.memory_space<vmem>>, vector<1x128xf32>
    %11 = vector.shape_cast %9 : vector<128xf32> to vector<1x128xf32>
    %12 = arith.addf %10, %11 : vector<1x128xf32>
    %c0_8 = arith.constant 0 : index
    %c0_9 = arith.constant 0 : index
    %13 = vector.load %arg11[%c0_8, %c0_9] : memref<8x128xf32, #tpu.memory_space<vmem>>, vector<1x128xf32>
    tpu.vector_store %arg11[%c0_8, %c0_9], %12 {strides = array<i32>} : memref<8x128xf32, #tpu.memory_space<vmem>>, vector<1x128xf32>,
    %c0_10 = arith.constant 0 : index
    %c0_11 = arith.constant 0 : index
    %c0_12 = arith.constant 0 : index
    %14 = vector.load %arg4[%c0_10, %c0_11, %c0_12] : memref<1x16x128xf32, #tpu.memory_space<vmem>>, vector<1x16x128xf32>
    %15 = vector.shape_cast %14 : vector<1x16x128xf32> to vector<16x128xf32>
    %c0_13 = arith.constant 0 : index
    %c0_14 = arith.constant 0 : index
    %c0_15 = arith.constant 0 : index
    %16 = vector.load %arg5[%c0_13, %c0_14, %c0_15] : memref<1x16x128xf32, #tpu.memory_space<vmem>>, vector<1x16x128xf32>
    %17 = vector.shape_cast %16 : vector<1x16x128xf32> to vector<16x128xf32>
    %18 = arith.subf %15, %17 : vector<16x128xf32>
    %19 = arith.mulf %18, %18 : vector<16x128xf32>
    %cst_16 = arith.constant dense<0.000000e+00> : vector<128xf32>
    %20 = vector.multi_reduction <add>, %19, %cst_16 [0] : vector<16x128xf32> to vector<128xf32>
    %c1 = arith.constant 1 : index
    %c0_17 = arith.constant 0 : index
    %21 = vector.load %arg11[%c1, %c0_17] : memref<8x128xf32, #tpu.memory_space<vmem>>, vector<1x128xf32>
    %22 = vector.shape_cast %20 : vector<128xf32> to vector<1x128xf32>
    %23 = arith.addf %21, %22 : vector<1x128xf32>
    %c1_18 = arith.constant 1 : index
    %c0_19 = arith.constant 0 : index
    %24 = vector.load %arg11[%c1_18, %c0_19] : memref<8x128xf32, #tpu.memory_space<vmem>>, vector<1x128xf32>
    tpu.vector_store %arg11[%c1_18, %c0_19], %23 {strides = array<i32>} : memref<8x128xf32, #tpu.memory_space<vmem>>, vector<1x128xf32>,
    %c0_20 = arith.constant 0 : index
    %c0_21 = arith.constant 0 : index
    %c0_22 = arith.constant 0 : index
    %25 = vector.load %arg6[%c0_20, %c0_21, %c0_22] : memref<1x16x128xf32, #tpu.memory_space<vmem>>, vector<1x16x128xf32>
    %26 = vector.shape_cast %25 : vector<1x16x128xf32> to vector<16x128xf32>
    %c0_23 = arith.constant 0 : index
    %c0_24 = arith.constant 0 : index
    %c0_25 = arith.constant 0 : index
    %27 = vector.load %arg7[%c0_23, %c0_24, %c0_25] : memref<1x16x128xf32, #tpu.memory_space<vmem>>, vector<1x16x128xf32>
    %28 = vector.shape_cast %27 : vector<1x16x128xf32> to vector<16x128xf32>
    %29 = arith.subf %26, %28 : vector<16x128xf32>
    %30 = arith.mulf %29, %29 : vector<16x128xf32>
    %cst_26 = arith.constant dense<0.000000e+00> : vector<128xf32>
    %31 = vector.multi_reduction <add>, %30, %cst_26 [0] : vector<16x128xf32> to vector<128xf32>
    %c2 = arith.constant 2 : index
    %c0_27 = arith.constant 0 : index
    %32 = vector.load %arg11[%c2, %c0_27] : memref<8x128xf32, #tpu.memory_space<vmem>>, vector<1x128xf32>
    %33 = vector.shape_cast %31 : vector<128xf32> to vector<1x128xf32>
    %34 = arith.addf %32, %33 : vector<1x128xf32>
    %c2_28 = arith.constant 2 : index
    %c0_29 = arith.constant 0 : index
    %35 = vector.load %arg11[%c2_28, %c0_29] : memref<8x128xf32, #tpu.memory_space<vmem>>, vector<1x128xf32>
    tpu.vector_store %arg11[%c2_28, %c0_29], %34 {strides = array<i32>} : memref<8x128xf32, #tpu.memory_space<vmem>>, vector<1x128xf32>,
    %c0_30 = arith.constant 0 : index
    %c0_31 = arith.constant 0 : index
    %c0_32 = arith.constant 0 : index
    %36 = vector.load %arg8[%c0_30, %c0_31, %c0_32] : memref<1x8x72xf32, #tpu.memory_space<vmem>>, vector<1x8x72xf32>
    %37 = vector.shape_cast %36 : vector<1x8x72xf32> to vector<8x72xf32>
    %c0_33 = arith.constant 0 : index
    %c0_34 = arith.constant 0 : index
    %c0_35 = arith.constant 0 : index
    %38 = vector.load %arg9[%c0_33, %c0_34, %c0_35] : memref<1x8x72xf32, #tpu.memory_space<vmem>>, vector<1x8x72xf32>
    %39 = vector.shape_cast %38 : vector<1x8x72xf32> to vector<8x72xf32>
    %40 = arith.subf %37, %39 : vector<8x72xf32>
    %41 = arith.mulf %40, %40 : vector<8x72xf32>
    %cst_36 = arith.constant dense<0.000000e+00> : vector<72xf32>
    %42 = vector.multi_reduction <add>, %41, %cst_36 [0] : vector<8x72xf32> to vector<72xf32>
    %c3 = arith.constant 3 : index
    %c0_37 = arith.constant 0 : index
    %43 = vector.load %arg11[%c3, %c0_37] : memref<8x128xf32, #tpu.memory_space<vmem>>, vector<1x72xf32>
    %44 = vector.shape_cast %42 : vector<72xf32> to vector<1x72xf32>
    %45 = arith.addf %43, %44 : vector<1x72xf32>
    %c3_38 = arith.constant 3 : index
    %c0_39 = arith.constant 0 : index
    %46 = vector.load %arg11[%c3_38, %c0_39] : memref<8x128xf32, #tpu.memory_space<vmem>>, vector<1x72xf32>
    tpu.vector_store %arg11[%c3_38, %c0_39], %45 {strides = array<i32>} : memref<8x128xf32, #tpu.memory_space<vmem>>, vector<1x72xf32>,
    %c1_i32 = arith.constant 1 : i32
    %47 = tpu.dynamic_rotate %40 by %c1_i32 dim 0 : vector<8x72xf32>, i32 -> vector<8x72xf32>
    %c7_i32 = arith.constant 7 : i32
    %48 = tpu.dynamic_rotate %40 by %c7_i32 dim 0 : vector<8x72xf32>, i32 -> vector<8x72xf32>
    %cst_40 = arith.constant 2.000000e+00 : f32
    %49 = vector.broadcast %cst_40 : f32 to vector<8x72xf32>
    %50 = arith.mulf %49, %40 : vector<8x72xf32>
    %51 = arith.subf %47, %50 : vector<8x72xf32>
    %52 = arith.addf %51, %48 : vector<8x72xf32>
    %53 = tpu.iota {dimensions = array<i32: 0>} : vector<8x72xi32>
    %54 = arith.sitofp %53 : vector<8x72xi32> to vector<8x72xf32>
    %cst_41 = arith.constant 1.250000e-01 : f32
    %55 = vector.broadcast %cst_41 : f32 to vector<8x72xf32>
    %56 = arith.mulf %54, %55 : vector<8x72xf32>
    %57 = math.floor %56 : vector<8x72xf32>
    %cst_42 = arith.constant 8.000000e+00 : f32
    %58 = vector.broadcast %cst_42 : f32 to vector<8x72xf32>
    %59 = arith.mulf %57, %58 : vector<8x72xf32>
    %60 = arith.subf %54, %59 : vector<8x72xf32>
    %cst_43 = arith.constant 5.000000e-01 : f32
    %61 = vector.broadcast %cst_43 : f32 to vector<8x72xf32>
    %62 = arith.cmpf ogt, %60, %61 : vector<8x72xf32>
    %cst_44 = arith.constant 6.500000e+00 : f32
    %63 = vector.broadcast %cst_44 : f32 to vector<8x72xf32>
    %64 = arith.cmpf olt, %60, %63 : vector<8x72xf32>
    %65 = arith.andi %62, %64 : vector<8x72xi1>
    %cst_45 = arith.constant 0.000000e+00 : f32
    %66 = vector.broadcast %cst_45 : f32 to vector<8x72xf32>
    %67 = arith.select %65, %52, %66 : vector<8x72xi1>, vector<8x72xf32>
    %68 = arith.mulf %67, %67 : vector<8x72xf32>
    %cst_46 = arith.constant dense<0.000000e+00> : vector<72xf32>
    %69 = vector.multi_reduction <add>, %68, %cst_46 [0] : vector<8x72xf32> to vector<72xf32>
    %c4 = arith.constant 4 : index
    %c0_47 = arith.constant 0 : index
    %70 = vector.load %arg11[%c4, %c0_47] : memref<8x128xf32, #tpu.memory_space<vmem>>, vector<1x72xf32>
    %71 = vector.shape_cast %69 : vector<72xf32> to vector<1x72xf32>
    %72 = arith.addf %70, %71 : vector<1x72xf32>
    %c4_48 = arith.constant 4 : index
    %c0_49 = arith.constant 0 : index
    %73 = vector.load %arg11[%c4_48, %c0_49] : memref<8x128xf32, #tpu.memory_space<vmem>>, vector<1x72xf32>
    tpu.vector_store %arg11[%c4_48, %c0_49], %72 {strides = array<i32>} : memref<8x128xf32, #tpu.memory_space<vmem>>, vector<1x72xf32>,
    %c0_50 = arith.constant 0 : index
    %c0_51 = arith.constant 0 : index
    %c0_52 = arith.constant 0 : index
    %74 = vector.load %arg10[%c0_50, %c0_51, %c0_52] : memref<1x8x10xf32, #tpu.memory_space<vmem>>, vector<1x8x10xf32>
    %cst_53 = arith.constant dense<0.000000e+00> : vector<1x10xf32>
    %75 = vector.multi_reduction <add>, %74, %cst_53 [1] : vector<1x8x10xf32> to vector<1x10xf32>
    %76 = vector.shape_cast %75 : vector<1x10xf32> to vector<1x1x10xf32>
    %cst_54 = arith.constant 1.250000e-01 : f32
    %77 = vector.broadcast %cst_54 : f32 to vector<1x1x10xf32>
    %78 = arith.mulf %76, %77 : vector<1x1x10xf32>
    %79 = vector.broadcast %78 : vector<1x1x10xf32> to vector<1x8x10xf32>
    %80 = arith.subf %74, %79 : vector<1x8x10xf32>
    %81 = arith.mulf %80, %80 : vector<1x8x10xf32>
    %cst_55 = arith.constant dense<0.000000e+00> : vector<8x10xf32>
    %82 = vector.multi_reduction <add>, %81, %cst_55 [0] : vector<1x8x10xf32> to vector<8x10xf32>
    %cst_56 = arith.constant dense<0.000000e+00> : vector<10xf32>
    %83 = vector.multi_reduction <add>, %82, %cst_56 [0] : vector<8x10xf32> to vector<10xf32>
    %c5 = arith.constant 5 : index
    %c0_57 = arith.constant 0 : index
    %84 = vector.load %arg11[%c5, %c0_57] : memref<8x128xf32, #tpu.memory_space<vmem>>, vector<1x10xf32>
    %85 = vector.shape_cast %83 : vector<10xf32> to vector<1x10xf32>
    %86 = arith.addf %84, %85 : vector<1x10xf32>
    %c5_58 = arith.constant 5 : index
    %c0_59 = arith.constant 0 : index
    %87 = vector.load %arg11[%c5_58, %c0_59] : memref<8x128xf32, #tpu.memory_space<vmem>>, vector<1x10xf32>
    tpu.vector_store %arg11[%c5_58, %c0_59], %86 {strides = array<i32>} : memref<8x128xf32, #tpu.memory_space<vmem>>, vector<1x10xf32>,
    return
  }
  func.func @transform_0(%arg0: i32, %arg1: i32) -> (i32, i32, i32) {
    %c1_i32 = arith.constant 1 : i32
    %0 = arith.muli %arg0, %c1_i32 : i32
    %1 = arith.addi %0, %arg1 : i32
    %c0_i32 = arith.constant 0 : i32
    %c0_i32_0 = arith.constant 0 : i32
    %c0_i32_1 = arith.constant 0 : i32
    return %1, %c0_i32, %c0_i32_0 : i32, i32, i32
  }
  func.func @transform_1(%arg0: i32, %arg1: i32) -> (i32, i32, i32) {
    %c1_i32 = arith.constant 1 : i32
    %0 = arith.muli %arg0, %c1_i32 : i32
    %1 = arith.addi %0, %arg1 : i32
    %c0_i32 = arith.constant 0 : i32
    %c0_i32_0 = arith.constant 0 : i32
    %c0_i32_1 = arith.constant 0 : i32
    return %1, %c0_i32, %c0_i32_0 : i32, i32, i32
  }
  func.func @transform_2(%arg0: i32, %arg1: i32) -> (i32, i32, i32) {
    %c1_i32 = arith.constant 1 : i32
    %0 = arith.muli %arg0, %c1_i32 : i32
    %1 = arith.addi %0, %arg1 : i32
    %c0_i32 = arith.constant 0 : i32
    %c0_i32_0 = arith.constant 0 : i32
    %c0_i32_1 = arith.constant 0 : i32
    return %1, %c0_i32, %c0_i32_0 : i32, i32, i32
  }
  func.func @transform_3(%arg0: i32, %arg1: i32) -> (i32, i32, i32) {
    %c1_i32 = arith.constant 1 : i32
    %0 = arith.muli %arg0, %c1_i32 : i32
    %1 = arith.addi %0, %arg1 : i32
    %c0_i32 = arith.constant 0 : i32
    %c0_i32_0 = arith.constant 0 : i32
    %c0_i32_1 = arith.constant 0 : i32
    return %1, %c0_i32, %c0_i32_0 : i32, i32, i32
  }
  func.func @transform_4(%arg0: i32, %arg1: i32) -> (i32, i32, i32) {
    %c1_i32 = arith.constant 1 : i32
    %0 = arith.muli %arg0, %c1_i32 : i32
    %1 = arith.addi %0, %arg1 : i32
    %c0_i32 = arith.constant 0 : i32
    %c0_i32_0 = arith.constant 0 : i32
    %c0_i32_1 = arith.constant 0 : i32
    return %1, %c0_i32, %c0_i32_0 : i32, i32, i32
  }
  func.func @transform_5(%arg0: i32, %arg1: i32) -> (i32, i32, i32) {
    %c1_i32 = arith.constant 1 : i32
    %0 = arith.muli %arg0, %c1_i32 : i32
    %1 = arith.addi %0, %arg1 : i32
    %c0_i32 = arith.constant 0 : i32
    %c0_i32_0 = arith.constant 0 : i32
    %c0_i32_1 = arith.constant 0 : i32
    return %1, %c0_i32, %c0_i32_0 : i32, i32, i32
  }
  func.func @transform_6(%arg0: i32, %arg1: i32) -> (i32, i32, i32) {
    %c1_i32 = arith.constant 1 : i32
    %0 = arith.muli %arg0, %c1_i32 : i32
    %1 = arith.addi %0, %arg1 : i32
    %c0_i32 = arith.constant 0 : i32
    %c0_i32_0 = arith.constant 0 : i32
    %c0_i32_1 = arith.constant 0 : i32
    return %1, %c0_i32, %c0_i32_0 : i32, i32, i32
  }
  func.func @transform_7(%arg0: i32, %arg1: i32) -> (i32, i32, i32) {
    %c1_i32 = arith.constant 1 : i32
    %0 = arith.muli %arg0, %c1_i32 : i32
    %1 = arith.addi %0, %arg1 : i32
    %c0_i32 = arith.constant 0 : i32
    %c0_i32_0 = arith.constant 0 : i32
    %c0_i32_1 = arith.constant 0 : i32
    return %1, %c0_i32, %c0_i32_0 : i32, i32, i32
  }
  func.func @transform_8(%arg0: i32, %arg1: i32) -> (i32, i32, i32) {
    %c1_i32 = arith.constant 1 : i32
    %0 = arith.muli %arg0, %c1_i32 : i32
    %1 = arith.addi %0, %arg1 : i32
    %c0_i32 = arith.constant 0 : i32
    %c0_i32_0 = arith.constant 0 : i32
    %c0_i32_1 = arith.constant 0 : i32
    return %1, %c0_i32, %c0_i32_0 : i32, i32, i32
  }
  func.func @transform_9(%arg0: i32, %arg1: i32) -> (i32, i32) {
    %c0_i32 = arith.constant 0 : i32
    %c0_i32_0 = arith.constant 0 : i32
    return %arg0, %c0_i32 : i32, i32
  }
}

</mosaic_0001>

<llo_original>
// kernel: pose_joint_loss.1
$region0: #{pose_joint_loss.1}
  #allocation0 [shape = 'u32[]', space=smem, size = 0x4, offset = 0x4, fixed_abs, tag = 'smem constant byte address 0x4 - core index']
  #allocation1 [shape = 'u32[72,128]{1,0:T(1,128)}', space=vmem, size = 0x9000, scoped, tag = 'internal scratch']
  %s0 = inlined_call_operand.vmem [shape: f32[2,8,128], index: 0, kind: input, shape index: {}]
  %s1 = inlined_call_operand.vmem [shape: f32[2,8,128], index: 1, kind: input, shape index: {}]
  %s2 = inlined_call_operand.vmem [shape: f32[2,16,128], index: 2, kind: input, shape index: {}]
  %s3 = inlined_call_operand.vmem [shape: f32[2,16,128], index: 3, kind: input, shape index: {}]
  %s4 = inlined_call_operand.vmem [shape: f32[2,16,128], index: 4, kind: input, shape index: {}]
  %s5 = inlined_call_operand.vmem [shape: f32[2,16,128], index: 5, kind: input, shape index: {}]
  %s6 = inlined_call_operand.vmem [shape: f32[2,8,72], index: 6, kind: input, shape index: {}]
  %s7 = inlined_call_operand.vmem [shape: f32[2,8,72], index: 7, kind: input, shape index: {}]
  %s8 = inlined_call_operand.vmem [shape: f32[2,8,10], index: 8, kind: input, shape index: {}]
  %s9 = inlined_call_operand.vmem [shape: f32[16,128], index: 9, kind: output, shape index: {}]
  %s10 = sld [smem:[#allocation0]]
  $region73: #{pose_joint_loss.1} parent=0
    _
  %s12 = ssub.s32 1, %s10
  %s13 = scalar_select 0, %s12, %s10
  loop: start=0, step=1, limit=4
  $region2: #{pose_joint_loss.1} parent=0 // loop_pre_header
    _
  $region3: #{pose_joint_loss.1} parent=0 // loop_header
    %s15 = sphi 0, %s19
    %p16 = scmp.ge.s32.totalorder %s15, 4
    %s22 = sphi 0, %s34
    %s23 = sphi 0, %s30
    %s24 = sphi 0, %s22
    %s25 = sphi 0, %s23
    %s26 = sphi 0, %s24
    %s27 = sphi 0, %s25
    %s39 = sphi 0, %s41
    %s42 = sphi 0, %s39
    %s43 = sphi 0, %s42
    %s59 = sphi 0, %s43
    %s67 = sphi 0, %s69
    %s70 = sphi 0, %s67
    %s71 = sphi 0, %s70
    %s87 = sphi 0, %s71
    %s95 = sphi 0, %s97
    %s98 = sphi 0, %s95
    %s99 = sphi 0, %s98
    %s115 = sphi 0, %s99
    %s123 = sphi 0, %s125
    %s126 = sphi 0, %s123
    %s127 = sphi 0, %s126
    %s143 = sphi 0, %s127
    %s151 = sphi 0, %s153
    %s154 = sphi 0, %s151
    %s155 = sphi 0, %s154
    %s171 = sphi 0, %s155
    %s179 = sphi 0, %s181
    %s182 = sphi 0, %s179
    %s183 = sphi 0, %s182
    %s199 = sphi 0, %s183
    %s207 = sphi 0, %s209
    %s210 = sphi 0, %s207
    %s211 = sphi 0, %s210
    %s227 = sphi 0, %s211
    %s235 = sphi 0, %s237
    %s238 = sphi 0, %s235
    %s239 = sphi 0, %s238
    %s255 = sphi 0, %s239
    %s263 = sphi 0, %s265
    %s266 = sphi 0, %s263
    %s267 = sphi 0, %s266
    %s283 = sphi 0, %s267
    %s289 = sphi 0, %s291
    %s292 = sphi 0, %s289
    %s293 = sphi 0, %s292
    %s309 = sphi 0, %s293
  $region4: #{pose_joint_loss.1} parent=0 // loop_header_branch
    %18 = sbr.rel (%p16) target = $region8
  $region5: #{pose_joint_loss.1} parent=0 // loop_body
    %s20 = ssub.s32 %s15, 1
    %s21 = ssub.s32 %s15, 2
    %s28 = sadd.s32 1, %s23
    %p29 = scmp.ge.s32.totalorder %s28, 1
    %s30 = scalar_select %p29, 0, %s28
    %s31 = sadd.s32 1, %s22
    %s32 = scalar_select %p29, %s31, %s22
    %p33 = scmp.ge.s32.totalorder %s32, 2
    %s34 = scalar_select %p33, 0, %s32
    %s35 = sadd.s32 %s22, %s23
    %s36 = sadd.s32 %s34, %s30
    %s37 = ssub.s32 %s35, %s36
    %p38 = scmp.eq.s32.totalorder %s37, 0
    %s40 = sadd.s32 %s39, 1
    %s41 = scalar_select %p38, %s39, %s40
    %p44 = pneg %p38
    %p45 = scmp.eq.s32.totalorder %s15, 1
    %p46 = por %p44, %p45
    %p47 = scmp.ne.s32.totalorder %s39, %s42
    %p48 = scmp.eq.s32.totalorder %s15, 0
    %p49 = por %p47, %p48
    %p50 = scmp.ne.s32.totalorder %s39, %s42
    %p51 = scmp.eq.s32.totalorder %s20, 1
    %p52 = por %p50, %p51
    %p53 = scmp.ne.s32.totalorder %s42, %s43
    %p54 = scmp.eq.s32.totalorder %s20, 0
    %p55 = por %p53, %p54
    %p56 = scmp.ne.s32.totalorder %s42, %s43
    %p57 = scmp.eq.s32.totalorder %s21, 1
    %p58 = por %p56, %p57
    %p60 = scmp.ne.s32.totalorder %s43, %s59
    %p61 = scmp.eq.s32.totalorder %s21, 0
    %p62 = por %p60, %p61
    %s63 = sadd.s32 %s22, %s23
    %s64 = sadd.s32 %s34, %s30
    %s65 = ssub.s32 %s63, %s64
    %p66 = scmp.eq.s32.totalorder %s65, 0
    %s68 = sadd.s32 %s67, 1
    %s69 = scalar_select %p66, %s67, %s68
    %p72 = pneg %p66
    %p73 = scmp.eq.s32.totalorder %s15, 1
    %p74 = por %p72, %p73
    %p75 = scmp.ne.s32.totalorder %s67, %s70
    %p76 = scmp.eq.s32.totalorder %s15, 0
    %p77 = por %p75, %p76
    %p78 = scmp.ne.s32.totalorder %s67, %s70
    %p79 = scmp.eq.s32.totalorder %s20, 1
    %p80 = por %p78, %p79
    %p81 = scmp.ne.s32.totalorder %s70, %s71
    %p82 = scmp.eq.s32.totalorder %s20, 0
    %p83 = por %p81, %p82
    %p84 = scmp.ne.s32.totalorder %s70, %s71
    %p85 = scmp.eq.s32.totalorder %s21, 1
    %p86 = por %p84, %p85
    %p88 = scmp.ne.s32.totalorder %s71, %s87
    %p89 = scmp.eq.s32.totalorder %s21, 0
    %p90 = por %p88, %p89
    %s91 = sadd.s32 %s22, %s23
    %s92 = sadd.s32 %s34, %s30
    %s93 = ssub.s32 %s91, %s92
    %p94 = scmp.eq.s32.totalorder %s93, 0
    %s96 = sadd.s32 %s95, 1
    %s97 = scalar_select %p94, %s95, %s96
    %p100 = pneg %p94
    %p101 = scmp.eq.s32.totalorder %s15, 1
    %p102 = por %p100, %p101
    %p103 = scmp.ne.s32.totalorder %s95, %s98
    %p104 = scmp.eq.s32.totalorder %s15, 0
    %p105 = por %p103, %p104
    %p106 = scmp.ne.s32.totalorder %s95, %s98
    %p107 = scmp.eq.s32.totalorder %s20, 1
    %p108 = por %p106, %p107
    %p109 = scmp.ne.s32.totalorder %s98, %s99
    %p110 = scmp.eq.s32.totalorder %s20, 0
    %p111 = por %p109, %p110
    %p112 = scmp.ne.s32.totalorder %s98, %s99
    %p113 = scmp.eq.s32.totalorder %s21, 1
    %p114 = por %p112, %p113
    %p116 = scmp.ne.s32.totalorder %s99, %s115
    %p117 = scmp.eq.s32.totalorder %s21, 0
    %p118 = por %p116, %p117
    %s119 = sadd.s32 %s22, %s23
    %s120 = sadd.s32 %s34, %s30
    %s121 = ssub.s32 %s119, %s120
    %p122 = scmp.eq.s32.totalorder %s121, 0
    %s124 = sadd.s32 %s123, 1
    %s125 = scalar_select %p122, %s123, %s124
    %p128 = pneg %p122
    %p129 = scmp.eq.s32.totalorder %s15, 1
    %p130 = por %p128, %p129
    %p131 = scmp.ne.s32.totalorder %s123, %s126
    %p132 = scmp.eq.s32.totalorder %s15, 0
    %p133 = por %p131, %p132
    %p134 = scmp.ne.s32.totalorder %s123, %s126
    %p135 = scmp.eq.s32.totalorder %s20, 1
    %p136 = por %p134, %p135
    %p137 = scmp.ne.s32.totalorder %s126, %s127
    %p138 = scmp.eq.s32.totalorder %s20, 0
    %p139 = por %p137, %p138
    %p140 = scmp.ne.s32.totalorder %s126, %s127
    %p141 = scmp.eq.s32.totalorder %s21, 1
    %p142 = por %p140, %p141
    %p144 = scmp.ne.s32.totalorder %s127, %s143
    %p145 = scmp.eq.s32.totalorder %s21, 0
    %p146 = por %p144, %p145
    %s147 = sadd.s32 %s22, %s23
    %s148 = sadd.s32 %s34, %s30
    %s149 = ssub.s32 %s147, %s148
    %p150 = scmp.eq.s32.totalorder %s149, 0
    %s152 = sadd.s32 %s151, 1
    %s153 = scalar_select %p150, %s151, %s152
    %p156 = pneg %p150
    %p157 = scmp.eq.s32.totalorder %s15, 1
    %p158 = por %p156, %p157
    %p159 = scmp.ne.s32.totalorder %s151, %s154
    %p160 = scmp.eq.s32.totalorder %s15, 0
    %p161 = por %p159, %p160
    %p162 = scmp.ne.s32.totalorder %s151, %s154
    %p163 = scmp.eq.s32.totalorder %s20, 1
    %p164 = por %p162, %p163
    %p165 = scmp.ne.s32.totalorder %s154, %s155
    %p166 = scmp.eq.s32.totalorder %s20, 0
    %p167 = por %p165, %p166
    %p168 = scmp.ne.s32.totalorder %s154, %s155
    %p169 = scmp.eq.s32.totalorder %s21, 1
    %p170 = por %p168, %p169
    %p172 = scmp.ne.s32.totalorder %s155, %s171
    %p173 = scmp.eq.s32.totalorder %s21, 0
    %p174 = por %p172, %p173
    %s175 = sadd.s32 %s22, %s23
    %s176 = sadd.s32 %s34, %s30
    %s177 = ssub.s32 %s175, %s176
    %p178 = scmp.eq.s32.totalorder %s177, 0
    %s180 = sadd.s32 %s179, 1
    %s181 = scalar_select %p178, %s179, %s180
    %p184 = pneg %p178
    %p185 = scmp.eq.s32.totalorder %s15, 1
    %p186 = por %p184, %p185
    %p187 = scmp.ne.s32.totalorder %s179, %s182
    %p188 = scmp.eq.s32.totalorder %s15, 0
    %p189 = por %p187, %p188
    %p190 = scmp.ne.s32.totalorder %s179, %s182
    %p191 = scmp.eq.s32.totalorder %s20, 1
    %p192 = por %p190, %p191
    %p193 = scmp.ne.s32.totalorder %s182, %s183
    %p194 = scmp.eq.s32.totalorder %s20, 0
    %p195 = por %p193, %p194
    %p196 = scmp.ne.s32.totalorder %s182, %s183
    %p197 = scmp.eq.s32.totalorder %s21, 1
    %p198 = por %p196, %p197
    %p200 = scmp.ne.s32.totalorder %s183, %s199
    %p201 = scmp.eq.s32.totalorder %s21, 0
    %p202 = por %p200, %p201
    %s203 = sadd.s32 %s22, %s23
    %s204 = sadd.s32 %s34, %s30
    %s205 = ssub.s32 %s203, %s204
    %p206 = scmp.eq.s32.totalorder %s205, 0
    %s208 = sadd.s32 %s207, 1
    %s209 = scalar_select %p206, %s207, %s208
    %p212 = pneg %p206
    %p213 = scmp.eq.s32.totalorder %s15, 1
    %p214 = por %p212, %p213
    %p215 = scmp.ne.s32.totalorder %s207, %s210
    %p216 = scmp.eq.s32.totalorder %s15, 0
    %p217 = por %p215, %p216
    %p218 = scmp.ne.s32.totalorder %s207, %s210
    %p219 = scmp.eq.s32.totalorder %s20, 1
    %p220 = por %p218, %p219
    %p221 = scmp.ne.s32.totalorder %s210, %s211
    %p222 = scmp.eq.s32.totalorder %s20, 0
    %p223 = por %p221, %p222
    %p224 = scmp.ne.s32.totalorder %s210, %s211
    %p225 = scmp.eq.s32.totalorder %s21, 1
    %p226 = por %p224, %p225
    %p228 = scmp.ne.s32.totalorder %s211, %s227
    %p229 = scmp.eq.s32.totalorder %s21, 0
    %p230 = por %p228, %p229
    %s231 = sadd.s32 %s22, %s23
    %s232 = sadd.s32 %s34, %s30
    %s233 = ssub.s32 %s231, %s232
    %p234 = scmp.eq.s32.totalorder %s233, 0
    %s236 = sadd.s32 %s235, 1
    %s237 = scalar_select %p234, %s235, %s236
    %p240 = pneg %p234
    %p241 = scmp.eq.s32.totalorder %s15, 1
    %p242 = por %p240, %p241
    %p243 = scmp.ne.s32.totalorder %s235, %s238
    %p244 = scmp.eq.s32.totalorder %s15, 0
    %p245 = por %p243, %p244
    %p246 = scmp.ne.s32.totalorder %s235, %s238
    %p247 = scmp.eq.s32.totalorder %s20, 1
    %p248 = por %p246, %p247
    %p249 = scmp.ne.s32.totalorder %s238, %s239
    %p250 = scmp.eq.s32.totalorder %s20, 0
    %p251 = por %p249, %p250
    %p252 = scmp.ne.s32.totalorder %s238, %s239
    %p253 = scmp.eq.s32.totalorder %s21, 1
    %p254 = por %p252, %p253
    %p256 = scmp.ne.s32.totalorder %s239, %s255
    %p257 = scmp.eq.s32.totalorder %s21, 0
    %p258 = por %p256, %p257
    %s259 = sadd.s32 %s22, %s23
    %s260 = sadd.s32 %s34, %s30
    %s261 = ssub.s32 %s259, %s260
    %p262 = scmp.eq.s32.totalorder %s261, 0
    %s264 = sadd.s32 %s263, 1
    %s265 = scalar_select %p262, %s263, %s264
    %p268 = pneg %p262
    %p269 = scmp.eq.s32.totalorder %s15, 1
    %p270 = por %p268, %p269
    %p271 = scmp.ne.s32.totalorder %s263, %s266
    %p272 = scmp.eq.s32.totalorder %s15, 0
    %p273 = por %p271, %p272
    %p274 = scmp.ne.s32.totalorder %s263, %s266
    %p275 = scmp.eq.s32.totalorder %s20, 1
    %p276 = por %p274, %p275
    %p277 = scmp.ne.s32.totalorder %s266, %s267
    %p278 = scmp.eq.s32.totalorder %s20, 0
    %p279 = por %p277, %p278
    %p280 = scmp.ne.s32.totalorder %s266, %s267
    %p281 = scmp.eq.s32.totalorder %s21, 1
    %p282 = por %p280, %p281
    %p284 = scmp.ne.s32.totalorder %s267, %s283
    %p285 = scmp.eq.s32.totalorder %s21, 0
    %p286 = por %p284, %p285
    %s287 = ssub.s32 %s22, %s34
    %p288 = scmp.eq.s32.totalorder %s287, 0
    %s290 = sadd.s32 %s289, 1
    %s291 = scalar_select %p288, %s289, %s290
    %p294 = pneg %p288
    %p295 = scmp.eq.s32.totalorder %s15, 1
    %p296 = por %p294, %p295
    %p297 = scmp.ne.s32.totalorder %s289, %s292
    %p298 = scmp.eq.s32.totalorder %s15, 0
    %p299 = por %p297, %p298
    %p300 = scmp.ne.s32.totalorder %s289, %s292
    %p301 = scmp.eq.s32.totalorder %s20, 1
    %p302 = por %p300, %p301
    %p303 = scmp.ne.s32.totalorder %s292, %s293
    %p304 = scmp.eq.s32.totalorder %s20, 0
    %p305 = por %p303, %p304
    %p306 = scmp.ne.s32.totalorder %s292, %s293
    %p307 = scmp.eq.s32.totalorder %s21, 1
    %p308 = por %p306, %p307
    %p310 = scmp.ne.s32.totalorder %s293, %s309
    %p311 = scmp.eq.s32.totalorder %s21, 0
    %p312 = por %p310, %p311
    %p313 = scmp.le.s32.totalorder 1, %s15
    %p314 = scmp.lt.s32.totalorder %s15, 3
    %p315 = pnand %p313, %p314
    %p316 = pneg %p315
    // Predicated region
    $region9: #{pose_joint_loss.1} parent=5 // pred_check
      _
    $region10: #{pose_joint_loss.1} parent=5 // pred_check_branch
      %318 = sbr.rel (%p315) target = $region12
    $region11: #{pose_joint_loss.1} parent=5 // pred_region
      %s319 = ssub.s32 %s15, 1
    $region12: #{pose_joint_loss.1} parent=5 // pred_fallthru
      _
    %p320 = scmp.lt.s32.totalorder %s15, 2
    // Predicated region
    $region13: #{pose_joint_loss.1} parent=5 // pred_check
      %p321 = pneg %p320
    $region14: #{pose_joint_loss.1} parent=5 // pred_check_branch
      %323 = sbr.rel (%p321) target = $region16
    $region15: #{pose_joint_loss.1} parent=5 // pred_region
      // Predicated region
      $region17: #{pose_joint_loss.1} parent=15 // pred_check
        %p324 = pneg %p49
      $region18: #{pose_joint_loss.1} parent=15 // pred_check_branch
        %326 = sbr.rel (%p324) target = $region20
      $region19: #{pose_joint_loss.1} parent=15 // pred_region
        %s327 = sadd.s32 %s22, %s23
        %p328 = scmp.lt.s32.totalorder %s327, 1
        %s329 = scalar_select %p328, %s327, 1
        %s330 = smul.addr %s329, 8
        %s331 = scalar_lea.vmem %s0, %s330
        %s332 = sadd.s32 %s22, %s23
      $region20: #{pose_joint_loss.1} parent=15 // pred_fallthru
        _
      // Predicated region
      $region21: #{pose_joint_loss.1} parent=15 // pred_check
        %p333 = pneg %p77
      $region22: #{pose_joint_loss.1} parent=15 // pred_check_branch
        %335 = sbr.rel (%p333) target = $region24
      $region23: #{pose_joint_loss.1} parent=15 // pred_region
        %s336 = sadd.s32 %s22, %s23
        %p337 = scmp.lt.s32.totalorder %s336, 1
        %s338 = scalar_select %p337, %s336, 1
        %s339 = smul.addr %s338, 8
        %s340 = scalar_lea.vmem %s1, %s339
        %s341 = sadd.s32 %s22, %s23
      $region24: #{pose_joint_loss.1} parent=15 // pred_fallthru
        _
      // Predicated region
      $region25: #{pose_joint_loss.1} parent=15 // pred_check
        %p342 = pneg %p105
      $region26: #{pose_joint_loss.1} parent=15 // pred_check_branch
        %344 = sbr.rel (%p342) target = $region28
      $region27: #{pose_joint_loss.1} parent=15 // pred_region
        %s345 = sadd.s32 %s22, %s23
        %p346 = scmp.lt.s32.totalorder %s345, 1
        %s347 = scalar_select %p346, %s345, 1
        %s348 = smul.addr %s347, 2
        %s349 = smul.addr %s348, 8
        %s350 = scalar_lea.vmem %s2, %s349
        %s351 = sadd.s32 %s22, %s23
      $region28: #{pose_joint_loss.1} parent=15 // pred_fallthru
        _
      // Predicated region
      $region29: #{pose_joint_loss.1} parent=15 // pred_check
        %p352 = pneg %p133
      $region30: #{pose_joint_loss.1} parent=15 // pred_check_branch
        %354 = sbr.rel (%p352) target = $region32
      $region31: #{pose_joint_loss.1} parent=15 // pred_region
        %s355 = sadd.s32 %s22, %s23
        %p356 = scmp.lt.s32.totalorder %s355, 1
        %s357 = scalar_select %p356, %s355, 1
        %s358 = smul.addr %s357, 2
        %s359 = smul.addr %s358, 8
        %s360 = scalar_lea.vmem %s3, %s359
        %s361 = sadd.s32 %s22, %s23
      $region32: #{pose_joint_loss.1} parent=15 // pred_fallthru
        _
      // Predicated region
      $region33: #{pose_joint_loss.1} parent=15 // pred_check
        %p362 = pneg %p161
      $region34: #{pose_joint_loss.1} parent=15 // pred_check_branch
        %364 = sbr.rel (%p362) target = $region36
      $region35: #{pose_joint_loss.1} parent=15 // pred_region
        %s365 = sadd.s32 %s22, %s23
        %p366 = scmp.lt.s32.totalorder %s365, 1
        %s367 = scalar_select %p366, %s365, 1
        %s368 = smul.addr %s367, 2
        %s369 = smul.addr %s368, 8
        %s370 = scalar_lea.vmem %s4, %s369
        %s371 = sadd.s32 %s22, %s23
      $region36: #{pose_joint_loss.1} parent=15 // pred_fallthru
        _
      // Predicated region
      $region37: #{pose_joint_loss.1} parent=15 // pred_check
        %p372 = pneg %p189
      $region38: #{pose_joint_loss.1} parent=15 // pred_check_branch
        %374 = sbr.rel (%p372) target = $region40
      $region39: #{pose_joint_loss.1} parent=15 // pred_region
        %s375 = sadd.s32 %s22, %s23
        %p376 = scmp.lt.s32.totalorder %s375, 1
        %s377 = scalar_select %p376, %s375, 1
        %s378 = smul.addr %s377, 2
        %s379 = smul.addr %s378, 8
        %s380 = scalar_lea.vmem %s5, %s379
        %s381 = sadd.s32 %s22, %s23
      $region40: #{pose_joint_loss.1} parent=15 // pred_fallthru
        _
      // Predicated region
      $region41: #{pose_joint_loss.1} parent=15 // pred_check
        %p382 = pneg %p217
      $region42: #{pose_joint_loss.1} parent=15 // pred_check_branch
        %384 = sbr.rel (%p382) target = $region44
      $region43: #{pose_joint_loss.1} parent=15 // pred_region
        %s385 = sadd.s32 %s22, %s23
        %p386 = scmp.lt.s32.totalorder %s385, 1
        %s387 = scalar_select %p386, %s385, 1
        %s388 = smul.addr %s387, 8
        %s389 = scalar_lea.vmem %s6, %s388
        %s390 = sadd.s32 %s22, %s23
      $region44: #{pose_joint_loss.1} parent=15 // pred_fallthru
        _
      // Predicated region
      $region45: #{pose_joint_loss.1} parent=15 // pred_check
        %p391 = pneg %p245
      $region46: #{pose_joint_loss.1} parent=15 // pred_check_branch
        %393 = sbr.rel (%p391) target = $region48
      $region47: #{pose_joint_loss.1} parent=15 // pred_region
        %s394 = sadd.s32 %s22, %s23
        %p395 = scmp.lt.s32.totalorder %s394, 1
        %s396 = scalar_select %p395, %s394, 1
        %s397 = smul.addr %s396, 8
        %s398 = scalar_lea.vmem %s7, %s397
        %s399 = sadd.s32 %s22, %s23
      $region48: #{pose_joint_loss.1} parent=15 // pred_fallthru
        _
      // Predicated region
      $region49: #{pose_joint_loss.1} parent=15 // pred_check
        %p400 = pneg %p273
      $region50: #{pose_joint_loss.1} parent=15 // pred_check_branch
        %402 = sbr.rel (%p400) target = $region52
      $region51: #{pose_joint_loss.1} parent=15 // pred_region
        %s403 = sadd.s32 %s22, %s23
        %p404 = scmp.lt.s32.totalorder %s403, 1
        %s405 = scalar_select %p404, %s403, 1
        %s406 = smul.addr %s405, 8
        %s407 = scalar_lea.vmem %s8, %s406
        %s408 = sadd.s32 %s22, %s23
      $region52: #{pose_joint_loss.1} parent=15 // pred_fallthru
        _
    $region16: #{pose_joint_loss.1} parent=5 // pred_fallthru
      _
    %p409 = scmp.le.s32.totalorder 1, %s15
    %p410 = scmp.lt.s32.totalorder %s15, 3
    %p411 = pnand %p409, %p410
    %p412 = pneg %p411
    // Predicated region
    $region53: #{pose_joint_loss.1} parent=5 // pred_check
      _
    $region54: #{pose_joint_loss.1} parent=5 // pred_check_branch
      %414 = sbr.rel (%p411) target = $region56
    $region55: #{pose_joint_loss.1} parent=5 // pred_region
      %s415 = ssub.s32 %s15, 1
      %s416 = sadd.s32 %s24, %s25
      %p417 = scmp.lt.s32.totalorder %s416, 1
      %s418 = scalar_select %p417, %s416, 1
      %s419 = smul.addr %s418, 8
      %s420 = scalar_lea.vmem %s0, %s419
      %p421 = pneg %p55
      %p422 = pneg %p52
      %s423 = sadd.s32 %s24, %s25
      %p424 = scmp.lt.s32.totalorder %s423, 1
      %s425 = scalar_select %p424, %s423, 1
      %s426 = smul.addr %s425, 8
      %s427 = scalar_lea.vmem %s1, %s426
      %p428 = pneg %p83
      %p429 = pneg %p80
      %s430 = sadd.s32 %s24, %s25
      %p431 = scmp.lt.s32.totalorder %s430, 1
      %s432 = scalar_select %p431, %s430, 1
      %s433 = smul.addr %s432, 2
      %s434 = smul.addr %s433, 8
      %s435 = scalar_lea.vmem %s2, %s434
      %p436 = pneg %p111
      %p437 = pneg %p108
      %s438 = sadd.s32 %s24, %s25
      %p439 = scmp.lt.s32.totalorder %s438, 1
      %s440 = scalar_select %p439, %s438, 1
      %s441 = smul.addr %s440, 2
      %s442 = smul.addr %s441, 8
      %s443 = scalar_lea.vmem %s3, %s442
      %p444 = pneg %p139
      %p445 = pneg %p136
      %s446 = sadd.s32 %s24, %s25
      %p447 = scmp.lt.s32.totalorder %s446, 1
      %s448 = scalar_select %p447, %s446, 1
      %s449 = smul.addr %s448, 2
      %s450 = smul.addr %s449, 8
      %s451 = scalar_lea.vmem %s4, %s450
      %p452 = pneg %p167
      %p453 = pneg %p164
      %s454 = sadd.s32 %s24, %s25
      %p455 = scmp.lt.s32.totalorder %s454, 1
      %s456 = scalar_select %p455, %s454, 1
      %s457 = smul.addr %s456, 2
      %s458 = smul.addr %s457, 8
      %s459 = scalar_lea.vmem %s5, %s458
      %p460 = pneg %p195
      %p461 = pneg %p192
      %s462 = sadd.s32 %s24, %s25
      %p463 = scmp.lt.s32.totalorder %s462, 1
      %s464 = scalar_select %p463, %s462, 1
      %s465 = smul.addr %s464, 8
      %s466 = scalar_lea.vmem %s6, %s465
      %p467 = pneg %p223
      %p468 = pneg %p220
      %s469 = sadd.s32 %s24, %s25
      %p470 = scmp.lt.s32.totalorder %s469, 1
      %s471 = scalar_select %p470, %s469, 1
      %s472 = smul.addr %s471, 8
      %s473 = scalar_lea.vmem %s7, %s472
      %p474 = pneg %p251
      %p475 = pneg %p248
      %s476 = sadd.s32 %s24, %s25
      %p477 = scmp.lt.s32.totalorder %s476, 1
      %s478 = scalar_select %p477, %s476, 1
      %s479 = smul.addr %s478, 8
      %s480 = scalar_lea.vmem %s8, %s479
      %p481 = pneg %p279
      %p482 = pneg %p276
      %p483 = pneg %p305
      %p484 = pneg %p302
      %p485 = scmp.lt.s32.totalorder %s24, 1
      %s486 = scalar_select %p485, %s24, 1
      %s487 = smul.addr %s486, 8
      %s488 = scalar_lea.vmem %s9, %s487
      %s489 = sadd.s32 %s24, %s25
      %p490 = scmp.lt.s32.totalorder %s489, 1
      %s491 = scalar_select %p490, %s489, 1
      %s492 = smul.addr %s491, 8
      %s493 = scalar_lea.vmem %s0, %s492
      %s494 = sadd.s32 %s24, %s25
      %s495 = sadd.s32 %s24, %s25
      %p496 = scmp.lt.s32.totalorder %s495, 1
      %s497 = scalar_select %p496, %s495, 1
      %s498 = smul.addr %s497, 8
      %s499 = scalar_lea.vmem %s1, %s498
      %s500 = sadd.s32 %s24, %s25
      %s501 = sadd.s32 %s24, %s25
      %p502 = scmp.lt.s32.totalorder %s501, 1
      %s503 = scalar_select %p502, %s501, 1
      %s504 = smul.addr %s503, 2
      %s505 = smul.addr %s504, 8
      %s506 = scalar_lea.vmem %s2, %s505
      %s507 = sadd.s32 %s24, %s25
      %s508 = sadd.s32 %s24, %s25
      %p509 = scmp.lt.s32.totalorder %s508, 1
      %s510 = scalar_select %p509, %s508, 1
      %s511 = smul.addr %s510, 2
      %s512 = smul.addr %s511, 8
      %s513 = scalar_lea.vmem %s3, %s512
      %s514 = sadd.s32 %s24, %s25
      %s515 = sadd.s32 %s24, %s25
      %p516 = scmp.lt.s32.totalorder %s515, 1
      %s517 = scalar_select %p516, %s515, 1
      %s518 = smul.addr %s517, 2
      %s519 = smul.addr %s518, 8
      %s520 = scalar_lea.vmem %s4, %s519
      %s521 = sadd.s32 %s24, %s25
      %s522 = sadd.s32 %s24, %s25
      %p523 = scmp.lt.s32.totalorder %s522, 1
      %s524 = scalar_select %p523, %s522, 1
      %s525 = smul.addr %s524, 2
      %s526 = smul.addr %s525, 8
      %s527 = scalar_lea.vmem %s5, %s526
      %s528 = sadd.s32 %s24, %s25
      %s529 = sadd.s32 %s24, %s25
      %p530 = scmp.lt.s32.totalorder %s529, 1
      %s531 = scalar_select %p530, %s529, 1
      %s532 = smul.addr %s531, 8
      %s533 = scalar_lea.vmem %s6, %s532
      %s534 = sadd.s32 %s24, %s25
      %s535 = sadd.s32 %s24, %s25
      %p536 = scmp.lt.s32.totalorder %s535, 1
      %s537 = scalar_select %p536, %s535, 1
      %s538 = smul.addr %s537, 8
      %s539 = scalar_lea.vmem %s7, %s538
      %s540 = sadd.s32 %s24, %s25
      %s541 = sadd.s32 %s24, %s25
      %p542 = scmp.lt.s32.totalorder %s541, 1
      %s543 = scalar_select %p542, %s541, 1
      %s544 = smul.addr %s543, 8
      %s545 = scalar_lea.vmem %s8, %s544
      %s546 = sadd.s32 %s24, %s25
      %p547 = scmp.lt.s32.totalorder %s24, 1
      %s548 = scalar_select %p547, %s24, 1
      %s549 = smul.addr %s548, 8
      %s550 = scalar_lea.vmem %s9, %s549
      %p551 = scmp.eq.s32.totalorder %s25, 0
      // Predicated region
      $region57: #{pose_joint_loss.1} parent=55 // pred_check
        %p552 = pneg %p551
      $region58: #{pose_joint_loss.1} parent=55 // pred_check_branch
        %554 = sbr.rel (%p552) target = $region60
      $region59: #{pose_joint_loss.1} parent=55 // pred_region
        %555 = vst [vmem:[%s550] sm:$0xff] 0.0
      $region60: #{pose_joint_loss.1} parent=55 // pred_fallthru
        _
      %v556 = vld [vmem:[%s493] sm:$0xff]
      %v557 = vld [vmem:[%s499] sm:$0xff]
      %v558 = vsub.f32 %v556, %v557
      %v559 = vmul.f32 %v558, %v558
      %v560 = vrot.slane %v559, 4
      %v561 = vadd.f32 %v559, %v560
      %v562 = vrot.slane %v561, 2
      %v563 = vadd.f32 %v561, %v562
      %v564 = vrot.slane %v563, 1
      %v565 = vadd.f32 %v563, %v564
      %v566 = vld [vmem:[%s550] sm:$0x1]
      %v567 = vadd.f32 %v566, %v565
      %568 = vst [vmem:[%s550] sm:$0x1] %v567
      %v569 = vld [vmem:[%s506] sm:$0xff]
      %v570 = vld [vmem:[%s506 + $0x8] sm:$0xff]
      %v571 = vld [vmem:[%s513] sm:$0xff]
      %v572 = vld [vmem:[%s513 + $0x8] sm:$0xff]
      %v573 = vsub.f32 %v569, %v571
      %v574 = vsub.f32 %v570, %v572
      %v575 = vmul.f32 %v573, %v573
      %v576 = vmul.f32 %v574, %v574
      %v577 = vadd.f32 %v575, %v576
      %v578 = vrot.slane %v577, 4
      %v579 = vadd.f32 %v577, %v578
      %v580 = vrot.slane %v579, 2
      %v581 = vadd.f32 %v579, %v580
      %v582 = vrot.slane %v581, 1
      %v583 = vadd.f32 %v581, %v582
      %v584 = vld [vmem:[%s550 + $0x1] sm:$0x1]
      %v585 = vadd.f32 %v584, %v583
      %586 = vst [vmem:[%s550 + $0x1] sm:$0x1] %v585
      %v587 = vld [vmem:[%s520] sm:$0xff]
      %v588 = vld [vmem:[%s520 + $0x8] sm:$0xff]
      %v589 = vld [vmem:[%s527] sm:$0xff]
      %v590 = vld [vmem:[%s527 + $0x8] sm:$0xff]
      %v591 = vsub.f32 %v587, %v589
      %v592 = vsub.f32 %v588, %v590
      %v593 = vmul.f32 %v591, %v591
      %v594 = vmul.f32 %v592, %v592
      %v595 = vadd.f32 %v593, %v594
      %v596 = vrot.slane %v595, 4
      %v597 = vadd.f32 %v595, %v596
      %v598 = vrot.slane %v597, 2
      %v599 = vadd.f32 %v597, %v598
      %v600 = vrot.slane %v599, 1
      %v601 = vadd.f32 %v599, %v600
      %v602 = vld [vmem:[%s550 + $0x2] sm:$0x1]
      %v603 = vadd.f32 %v602, %v601
      %604 = vst [vmem:[%s550 + $0x2] sm:$0x1] %v603
      %v605 = vld [vmem:[%s533] sm:$0xff]
      %v606 = vld [vmem:[%s539] sm:$0xff]
      %v607 = vsub.f32 %v605, %v606
      %v608 = vmul.f32 %v607, %v607
      %vm609 = vcmask 588800
      %v610 = vsel %vm609, %v608, 0.0
      %v611 = vrot.slane %v610, 4
      %v612 = vadd.f32 %v610, %v611
      %v613 = vrot.slane %v612, 2
      %v614 = vadd.f32 %v612, %v613
      %v615 = vrot.slane %v614, 1
      %v616 = vadd.f32 %v614, %v615
      %v617 = vld [vmem:[%s550 + $0x3] sm:$0x1]
      %v618 = vadd.f32 %v617, %v616
      %vm619 = vcmask 581632
      %620 = vst.msk [vmem:[%s550 + $0x3] sm:$0x1] %vm619, %v618
      %v621 = vrot.slane %v607, 7
      %v622 = vrot.slane %v607, 1
      %v623 = vmul.f32 %v607, 2.0
      %v624 = vsub.f32 %v621, %v623
      %v625 = vadd.f32 %v624, %v622
      %v626 = vlaneseq
      %v627 = vshrl.u32 %v626, 7
      %v628 = vcvt.s32.f32 %v627
      %v629 = vmul.f32 %v628, 0.125
      %v630 = vfloor.f32 %v629
      %v631 = vmul.f32 %v630, 8.0
      %v632 = vsub.f32 %v628, %v631
      %vm633 = vcmp.gt.f32.partialorder %v632, 0.5
      %vm634 = vcmp.lt.f32.partialorder %v632, 6.5
      %vm635 = vmand %vm633, %vm634
      %v636 = vsel %vm635, %v625, 0.0
      %v637 = vmul.f32 %v636, %v636
      %v638 = vsel %vm609, %v637, 0.0
      %v639 = vrot.slane %v638, 4
      %v640 = vadd.f32 %v638, %v639
      %v641 = vrot.slane %v640, 2
      %v642 = vadd.f32 %v640, %v641
      %v643 = vrot.slane %v642, 1
      %v644 = vadd.f32 %v642, %v643
      %v645 = vld [vmem:[%s550 + $0x4] sm:$0x1]
      %v646 = vadd.f32 %v645, %v644
      %647 = vst.msk [vmem:[%s550 + $0x4] sm:$0x1] %vm619, %v646
      %v648 = vld [vmem:[%s545] sm:$0xff]
      %vm649 = vcmask 80896
      %v650 = vsel %vm649, %v648, 0.0
      %v651 = vrot.slane %v650, 4
      %v652 = vadd.f32 %v650, %v651
      %v653 = vrot.slane %v652, 2
      %v654 = vadd.f32 %v652, %v653
      %v655 = vrot.slane %v654, 1
      %v656 = vadd.f32 %v654, %v655
      %v657 = vmul.f32 %v656, 0.125
      %v658 = vsub.f32 %v648, %v657
      %v659 = vmul.f32 %v658, %v658
      %v660 = vadd.f32 %v659, 0.0
      %v661 = vsel %vm649, %v660, 0.0
      %v662 = vrot.slane %v661, 4
      %v663 = vadd.f32 %v661, %v662
      %v664 = vrot.slane %v663, 2
      %v665 = vadd.f32 %v663, %v664
      %v666 = vrot.slane %v665, 1
      %v667 = vadd.f32 %v665, %v666
      %v668 = vld [vmem:[%s550 + $0x5] sm:$0x1]
      %v669 = vadd.f32 %v668, %v667
      %vm670 = vcmask 73728
      %671 = vst.msk [vmem:[%s550 + $0x5] sm:$0x1] %vm670, %v669
      %p672 = scmp.lt.s32.totalorder %s24, 1
      %s673 = scalar_select %p672, %s24, 1
      %s674 = smul.addr %s673, 8
      %s675 = scalar_lea.vmem %s9, %s674
      // Predicated region
      $region61: #{pose_joint_loss.1} parent=55 // pred_check
        %p676 = pneg %p302
      $region62: #{pose_joint_loss.1} parent=55 // pred_check_branch
        %678 = sbr.rel (%p676) target = $region64
      $region63: #{pose_joint_loss.1} parent=55 // pred_region
        _
      $region64: #{pose_joint_loss.1} parent=55 // pred_fallthru
        _
    $region56: #{pose_joint_loss.1} parent=5 // pred_fallthru
      _
    %p679 = scmp.le.s32.totalorder 2, %s15
    // Predicated region
    $region65: #{pose_joint_loss.1} parent=5 // pred_check
      %p680 = pneg %p679
    $region66: #{pose_joint_loss.1} parent=5 // pred_check_branch
      %682 = sbr.rel (%p680) target = $region68
    $region67: #{pose_joint_loss.1} parent=5 // pred_region
      %s683 = ssub.s32 %s15, 2
      // Predicated region
      $region69: #{pose_joint_loss.1} parent=67 // pred_check
        %p684 = pneg %p308
      $region70: #{pose_joint_loss.1} parent=67 // pred_check_branch
        %686 = sbr.rel (%p684) target = $region72
      $region71: #{pose_joint_loss.1} parent=67 // pred_region
        %p687 = scmp.lt.s32.totalorder %s26, 1
        %s688 = scalar_select %p687, %s26, 1
        %s689 = smul.addr %s688, 8
        %s690 = scalar_lea.vmem %s9, %s689
      $region72: #{pose_joint_loss.1} parent=67 // pred_fallthru
        _
    $region68: #{pose_joint_loss.1} parent=5 // pred_fallthru
      _
  $region6: #{pose_joint_loss.1} parent=0 // loop_footer
    %s19 = sadd.s32 1, %s15
  $region7: #{pose_joint_loss.1} parent=0 // loop_footer_branch
    %14 = sbr.rel target = $region3
  $region8: #{pose_joint_loss.1} parent=0 // loop_exit
    _

</llo_original>
